<compile_context>
chip_gen: v6e
topology: v6e:2x2x1
jax: 0.10.0
libtpu: 0.0.40
codegen_flags: <defaults>
</compile_context>

<pallas_src>
import functools
import math

import jax
import jax.numpy as jnp
from jax.experimental import pallas as pl
from jax.experimental.pallas import tpu as pltpu


def _round_up(x: int, m: int) -> int:
    return ((x + m - 1) // m) * m


def _broadcast_pos_rows(pos, batch):
    """(Ts, E) positional rows -> (Ts*batch, E), each row repeated `batch` times.

    Matches the row order of a row-major (S, B, E) -> (S*B, E) flatten.
    """
    ts, e = pos.shape
    if batch == 1:
        return pos
    return jnp.broadcast_to(pos[:, None, :], (ts, batch, e)).reshape(ts * batch, e)


def _pe_add_kernel(tok_ref, pos_ref, out_ref, *, batch):
    """Eval-mode body: out = tok + pos (pos broadcast over the batch rows).

    tok_ref : (tile_rows, E) lane-dense tile of flattened token embeddings
    pos_ref : (tile_rows // batch, E) matching positional rows
    out_ref : (tile_rows, E)
    """
    pos_rows = _broadcast_pos_rows(pos_ref[...], batch)
    out_ref[...] = (tok_ref[...] + pos_rows).astype(out_ref.dtype)


def _pe_add_dropout_kernel(tok_ref, pos_ref, bits_ref, out_ref, *,
                           batch, threshold, scale):
    """Train-mode body: out = dropout(tok + pos, p) via integer-threshold mask."""
    pos_rows = _broadcast_pos_rows(pos_ref[...], batch)
    x = tok_ref[...] + pos_rows                          # stay in the input dtype
    keep = bits_ref[...] >= jnp.uint32(threshold)        # keep with prob 1 - p
    out_ref[...] = jnp.where(keep, x * jnp.asarray(scale, x.dtype),
                             jnp.zeros_like(x)).astype(out_ref.dtype)


def make_pos_embedding(emb_size: int, maxlen: int = 500) -> jnp.ndarray:
    """Builds the (maxlen, emb_size) sin/cos table exactly as the PyTorch ctor."""
    den = jnp.exp(
        -jnp.arange(0, emb_size, 2, dtype=jnp.float32) * (math.log(10000.0) / emb_size))
    pos = jnp.arange(0, maxlen, dtype=jnp.float32)[:, None]        # (maxlen, 1)
    pe = jnp.zeros((maxlen, emb_size), dtype=jnp.float32)
    pe = pe.at[:, 0::2].set(jnp.sin(pos * den))
    pe = pe.at[:, 1::2].set(jnp.cos(pos * den))
    return pe


def positional_encoding_forward(token_embedding, pos_embedding, *,
                                dropout_p: float = 0.0,
                                deterministic: bool = True,
                                seed: int = 0,
                                tile_s=None):
    """q = dropout(token_embedding + pos_embedding[:S]) with Pallas on TPU.

    token_embedding : (S, B, E)
    pos_embedding   : (maxlen, E)  (PyTorch buffer's singleton batch dim dropped;
                                    broadcast over B happens in-kernel)
    """
    s, b, e = token_embedding.shape
    maxlen, e2 = pos_embedding.shape
    assert e == e2, "embedding size mismatch"
    assert s <= maxlen, "sequence length exceeds maxlen"

    dtype = token_embedding.dtype
    itemsize = jnp.dtype(dtype).itemsize
    granule = {4: 8, 2: 16, 1: 32}.get(itemsize, 8)       # sublane packing granule
    e_pad = _round_up(max(e, 1), 128)                     # padded lane extent

    apply_dropout = (not deterministic) and dropout_p > 0.0
    if apply_dropout and dropout_p >= 1.0:
        return jnp.zeros_like(token_embedding)

    # ---- sequence-tile size from *padded* VMEM bytes (dtype-aware) ----------
    if tile_s is None:
        bytes_per_seq = b * e_pad * itemsize              # padded bytes / seq row in a tok tile
        budget = 4 * 1024 * 1024                          # ~4 MiB per buffered operand tile
        tile_s = max(granule, min(4096, budget // max(bytes_per_seq, 1)))
        tile_s = max(granule, (tile_s // granule) * granule)
        if s > granule:                                   # keep >=2 grid steps (v7x megacore)
            tile_s = min(tile_s, _round_up(pl.cdiv(s, 2), granule))
    if tile_s >= s:
        tile_s = s                                        # single full-extent block (always legal)
    else:
        tile_s = max(granule, (tile_s // granule) * granule)

    grid = (pl.cdiv(s, tile_s),)
    tile_rows = tile_s * b
    rows = s * b

    # Lane-dense views: free row-major reshape; pos pre-cast to the token dtype.
    tok2 = token_embedding.reshape(rows, e)
    pos2 = pos_embedding[:s].astype(dtype)

    # ---- explicit scoped-VMEM limit from the padded, double-buffered tiles ---
    pad_rows = _round_up(tile_rows, granule)
    pad_pos_rows = _round_up(tile_s, granule)
    tok_tile_bytes = pad_rows * e_pad * itemsize
    pos_tile_bytes = pad_pos_rows * e_pad * itemsize
    bits_tile_bytes = pad_rows * e_pad * 4
    footprint = 2 * (2 * tok_tile_bytes + pos_tile_bytes
                     + (bits_tile_bytes if apply_dropout else 0))
    vmem_limit = int(min(56 * 2**20, max(32 * 2**20, footprint + 8 * 2**20)))

    out_shape = jax.ShapeDtypeStruct((rows, e), dtype)
    tok_spec = pl.BlockSpec((tile_rows, e), lambda i: (i, 0))
    pos_spec = pl.BlockSpec((tile_s, e), lambda i: (i, 0))
    out_spec = pl.BlockSpec((tile_rows, e), lambda i: (i, 0))
    params = pltpu.CompilerParams(dimension_semantics=("parallel",),
                                  vmem_limit_bytes=vmem_limit)

    if not apply_dropout:
        out2 = pl.pallas_call(
            functools.partial(_pe_add_kernel, batch=b),
            out_shape=out_shape,
            grid=grid,
            in_specs=[tok_spec, pos_spec],
            out_specs=out_spec,
            compiler_params=params,
        )(tok2, pos2)
        return out2.reshape(s, b, e)

    # Train mode: precomputed uniform uint32 bits; keep iff bits >= p * 2^32.
    p = float(dropout_p)
    threshold = min(int(round(p * (2 ** 32))), 2 ** 32 - 1)
    scale = 1.0 / (1.0 - p)
    bits = jax.random.bits(jax.random.PRNGKey(seed), (rows, e), dtype=jnp.uint32)
    bits_spec = pl.BlockSpec((tile_rows, e), lambda i: (i, 0))

    out2 = pl.pallas_call(
        functools.partial(_pe_add_dropout_kernel, batch=b,
                          threshold=threshold, scale=scale),
        out_shape=out_shape,
        grid=grid,
        in_specs=[tok_spec, pos_spec, bits_spec],
        out_specs=out_spec,
        compiler_params=params,
    )(tok2, pos2, bits)
    return out2.reshape(s, b, e)


def positional_encoding_ref(token_embedding, pos_embedding):
    """Pure-JAX reference (eval mode: dropout is identity)."""
    s = token_embedding.shape[0]
    return token_embedding + pos_embedding[:s][:, None, :]


if __name__ == "__main__":
    # Small config consistent with the module: emb_size=32, maxlen=64,
    # seq=8, batch=2, dropout=0.1.
    EMB = 32
    MAXLEN = 64
    SEQ = 8
    BATCH = 2
    DROPOUT_P = 0.1

    key = jax.random.PRNGKey(0)
    tok = jax.random.normal(key, (SEQ, BATCH, EMB), dtype=jnp.float32)
    pe = make_pos_embedding(EMB, MAXLEN)

    # Eval mode (dropout is identity): compare to reference.
    out = positional_encoding_forward(tok, pe, dropout_p=DROPOUT_P,
                                      deterministic=True)
    out = jax.block_until_ready(out)
    ref = positional_encoding_ref(tok, pe)
    if not jnp.allclose(out, ref, atol=1e-6, rtol=1e-6):
        raise AssertionError("Pallas PositionalEncoding kernel mismatch vs reference")

    # Train mode: in-kernel masked dropout driven by precomputed random bits.
    # (Matches PyTorch dropout in distribution, not bit-for-bit.)
    out_d = positional_encoding_forward(tok, pe, dropout_p=DROPOUT_P,
                                        deterministic=False, seed=0)
    out_d = jax.block_until_ready(out_d)
    if out_d.shape != (SEQ, BATCH, EMB) or not bool(jnp.all(jnp.isfinite(out_d))):
        raise AssertionError("dropout path produced invalid output")
    # Surviving (non-zeroed) elements must equal the eval output scaled by 1/(1-p).
    kept = out_d != 0.0
    scale = 1.0 / (1.0 - DROPOUT_P)
    if not jnp.allclose(jnp.where(kept, out_d, 0.0),
                        jnp.where(kept, ref * scale, 0.0),
                        atol=1e-5, rtol=1e-5):
        raise AssertionError("dropout path mismatch on kept elements")

    print("KERNEL_OK")
</pallas_src>

<mosaic_0001>
module attributes {stable_mosaic.version = 11 : i64} {
  func.func @_pe_add_kernel(%arg0: i32, %arg1: memref<16x32xf32, #tpu.memory_space<vmem>>, %arg2: memref<8x32xf32, #tpu.memory_space<vmem>>, %arg3: memref<16x32xf32, #tpu.memory_space<vmem>>) attributes {dimension_semantics = [#tpu.dimension_semantics<parallel>], iteration_bounds = array<i64: 1>, scalar_prefetch = 0 : i64, scratch_operands = 0 : i64, tpu.core_type = #tpu.core_type<tc>, window_params = [{transform_indices = @transform_0, window_bounds = array<i64: 16, 32>}, {transform_indices = @transform_1, window_bounds = array<i64: 8, 32>}, {transform_indices = @transform_2, window_bounds = array<i64: 16, 32>}]} {
    %c0 = arith.constant 0 : index
    %c0_0 = arith.constant 0 : index
    %0 = vector.load %arg2[%c0, %c0_0] : memref<8x32xf32, #tpu.memory_space<vmem>>, vector<8x32xf32>
    %1 = vector.shape_cast %0 : vector<8x32xf32> to vector<8x1x32xf32>
    %2 = vector.shape_cast %1 : vector<8x1x32xf32> to vector<8x1x32xf32>
    %3 = vector.broadcast %2 : vector<8x1x32xf32> to vector<8x2x32xf32>
    %4 = vector.shape_cast %3 : vector<8x2x32xf32> to vector<16x32xf32>
    %c0_1 = arith.constant 0 : index
    %c0_2 = arith.constant 0 : index
    %5 = vector.load %arg1[%c0_1, %c0_2] : memref<16x32xf32, #tpu.memory_space<vmem>>, vector<16x32xf32>
    %6 = arith.addf %5, %4 : vector<16x32xf32>
    %c0_3 = arith.constant 0 : index
    %c0_4 = arith.constant 0 : index
    %7 = vector.load %arg3[%c0_3, %c0_4] : memref<16x32xf32, #tpu.memory_space<vmem>>, vector<16x32xf32>
    tpu.vector_store %arg3[%c0_3, %c0_4], %6 {strides = array<i32>} : memref<16x32xf32, #tpu.memory_space<vmem>>, vector<16x32xf32>,
    return
  }
  func.func @transform_0(%arg0: i32) -> (i32, i32) {
    %c0_i32 = arith.constant 0 : i32
    %c0_i32_0 = arith.constant 0 : i32
    return %arg0, %c0_i32 : i32, i32
  }
  func.func @transform_1(%arg0: i32) -> (i32, i32) {
    %c0_i32 = arith.constant 0 : i32
    %c0_i32_0 = arith.constant 0 : i32
    return %arg0, %c0_i32 : i32, i32
  }
  func.func @transform_2(%arg0: i32) -> (i32, i32) {
    %c0_i32 = arith.constant 0 : i32
    %c0_i32_0 = arith.constant 0 : i32
    return %arg0, %c0_i32 : i32, i32
  }
}

</mosaic_0001>

<llo_original>
// kernel: tpu_custom_call.1
$region0: #{tpu_custom_call.1}
  #allocation0 [shape = 'u32[]', space=smem, size = 0x4, offset = 0x4, fixed_abs, tag = 'smem constant byte address 0x4 - core index']
  #allocation1 [shape = 'u32[144,128]{1,0:T(1,128)}', space=vmem, size = 0x12000, scoped, tag = 'internal scratch']
  %s0 = inlined_call_operand.hbm [shape: f32[16,32], index: 0, kind: input, shape index: {}]
  %s1 = inlined_call_operand.hbm [shape: f32[8,32], index: 1, kind: input, shape index: {}]
  %s2 = inlined_call_operand.hbm [shape: f32[16,32], index: 2, kind: output, shape index: {}]
  %s3 = sld [smem:[#allocation0]]
  $region26: #{tpu_custom_call.1} parent=0
    _
  %s5 = ssub.s32 1, %s3
  %s6 = scalar_select 0, %s5, %s3
  $region1: #{tpu_custom_call.1} parent=0
    #allocation2 [shape = 'u8[8192]{0}', space=vmem, size = 0x2000, scoped, tag = 'input window, operand 0, single buffered']
    #allocation3 [shape = 's32[1]{0}', space=sflag, size = 0x4, scoped, tag = 'scoped memory for tpu_custom_call.1']
    #allocation4 [shape = 's32[1]{0}', space=sflag, size = 0x4, scoped, tag = 'scoped memory for tpu_custom_call.1']
    #allocation5 [shape = 'u8[4096]{0}', space=vmem, size = 0x1000, scoped, tag = 'input window, operand 1, single buffered']
    #allocation6 [shape = 's32[1]{0}', space=sflag, size = 0x4, scoped, tag = 'scoped memory for tpu_custom_call.1']
    #allocation7 [shape = 'u8[8192]{0}', space=vmem, size = 0x2000, scoped, tag = 'output window, operand 0, single buffered']
    %7 = vsyncpa [#allocation3], 0
    %8 = vsyncpa [#allocation6], 0
    %9 = vsyncpa [#allocation4], 0
    // Predicated region
    $region2: #{tpu_custom_call.1} parent=1 // pred_check
      _
    $region3: #{tpu_custom_call.1} parent=1 // pred_check_branch
      %11 = sbr.rel (0) target = $region5
    $region4: #{tpu_custom_call.1} parent=1 // pred_region
      %s13 = ssub.s32 256, 256
      %14 = vsyncadd [#allocation3], %s13
      %s15 = sshll.u32 [#allocation2], 4
      %s16 = int_to_ptr.vmem [resolvable:$true] %s15
      %21 = dma.hbm_to_vmem [thread:$0]  %s0, 256, %s16, [#allocation3], 128, 128, 8
    $region5: #{tpu_custom_call.1} parent=1 // pred_fallthru
      _
    // Predicated region
    $region6: #{tpu_custom_call.1} parent=1 // pred_check
      _
    $region7: #{tpu_custom_call.1} parent=1 // pred_check_branch
      %23 = sbr.rel (0) target = $region9
    $region8: #{tpu_custom_call.1} parent=1 // pred_region
      %s25 = ssub.s32 128, 128
      %26 = vsyncadd [#allocation6], %s25
      %s28 = sshll.u32 [#allocation5], 4
      %s29 = int_to_ptr.vmem [resolvable:$true] %s28
      %31 = dma.hbm_to_vmem [thread:$0]  %s1, 128, %s29, [#allocation6]
    $region9: #{tpu_custom_call.1} parent=1 // pred_fallthru
      _
    // Predicated region
    $region10: #{tpu_custom_call.1} parent=1 // pred_check
      _
    $region11: #{tpu_custom_call.1} parent=1 // pred_check_branch
      %33 = sbr.rel (0) target = $region13
    $region12: #{tpu_custom_call.1} parent=1 // pred_region
      %34 = dma.done [#allocation3], 256
    $region13: #{tpu_custom_call.1} parent=1 // pred_fallthru
      _
    // Predicated region
    $region14: #{tpu_custom_call.1} parent=1 // pred_check
      _
    $region15: #{tpu_custom_call.1} parent=1 // pred_check_branch
      %36 = sbr.rel (0) target = $region17
    $region16: #{tpu_custom_call.1} parent=1 // pred_region
      %37 = dma.done [#allocation6], 128
    $region17: #{tpu_custom_call.1} parent=1 // pred_fallthru
      _
    %v38 = vld [vmem:[#allocation5] sm:$0xff]
    %v40 = vcombine.high %v38, %v38
    %v42 = vunpack.c.l.s4 1966171168
    %v43 = vunpack.c.0.s8 %v42
    %v44 = vlaneseq
    %v45 = vshrl.u32 %v44, 7
    %v46 = vsub.s32 %v43, %v45
    %v47 = vrot.slane %v38, %v46
    %v49 = vunpack.c.l.s4 1966171168
    %v50 = vunpack.c.0.s8 %v49
    %v51 = vlaneseq
    %v52 = vshrl.u32 %v51, 7
    %v53 = vsub.s32 %v50, %v52
    %v54 = vrot.slane %v40, %v53
    %v55 = vcombine.high %v47, %v47
    %v56 = vcombine.high %v54, %v54
    %v58 = vunpack.c.l.s4 1966171168
    %v59 = vunpack.c.0.s8 %v58
    %v60 = vlaneseq
    %v61 = vshrl.u32 %v60, 7
    %v62 = vsub.s32 %v59, %v61
    %v63 = vrot.slane %v47, %v62
    %v65 = vunpack.c.l.s4 1966171168
    %v66 = vunpack.c.0.s8 %v65
    %v67 = vlaneseq
    %v68 = vshrl.u32 %v67, 7
    %v69 = vsub.s32 %v66, %v68
    %v70 = vrot.slane %v54, %v69
    %v72 = vunpack.c.l.s4 1966171168
    %v73 = vunpack.c.0.s8 %v72
    %v74 = vlaneseq
    %v75 = vshrl.u32 %v74, 7
    %v76 = vsub.s32 %v73, %v75
    %v77 = vrot.slane %v55, %v76
    %v79 = vunpack.c.l.s4 1966171168
    %v80 = vunpack.c.0.s8 %v79
    %v81 = vlaneseq
    %v82 = vshrl.u32 %v81, 7
    %v83 = vsub.s32 %v80, %v82
    %v84 = vrot.slane %v56, %v83
    %v85 = vcombine.high %v63, %v63
    %v86 = vcombine.high %v70, %v70
    %v87 = vcombine.high %v77, %v77
    %v88 = vcombine.high %v84, %v84
    %v89 = vlaneseq
    %v90 = vshrl.u32 %v89, 7
    %v91 = vsub.s32 0, %v90
    %v92 = vrot.slane %v63, %v91
    %v93 = vlaneseq
    %v94 = vshrl.u32 %v93, 7
    %v95 = vsub.s32 0, %v94
    %v96 = vrot.slane %v77, %v95
    %v97 = vlaneseq
    %v98 = vshrl.u32 %v97, 7
    %v99 = vsub.s32 0, %v98
    %v100 = vrot.slane %v85, %v99
    %v101 = vlaneseq
    %v102 = vshrl.u32 %v101, 7
    %v103 = vsub.s32 0, %v102
    %v104 = vrot.slane %v87, %v103
    %v105 = vlaneseq
    %v106 = vshrl.u32 %v105, 7
    %v107 = vsub.s32 0, %v106
    %v108 = vrot.slane %v70, %v107
    %v109 = vlaneseq
    %v110 = vshrl.u32 %v109, 7
    %v111 = vsub.s32 0, %v110
    %v112 = vrot.slane %v84, %v111
    %v113 = vlaneseq
    %v114 = vshrl.u32 %v113, 7
    %v115 = vsub.s32 0, %v114
    %v116 = vrot.slane %v86, %v115
    %v117 = vlaneseq
    %v118 = vshrl.u32 %v117, 7
    %v119 = vsub.s32 0, %v118
    %v120 = vrot.slane %v88, %v119
    %v121 = vld [vmem:[#allocation2] sm:$0xff]
    %v122 = vld [vmem:[#allocation2 + $0x8] sm:$0xff]
    %v123 = vcombine.low %v92, %v96
    %v124 = vcombine.low %v100, %v104
    %v126 = vunpack.c.l.s4 1983009808
    %v127 = vunpack.c.0.s8 %v126
    %v128 = vlaneseq
    %v129 = vshrl.u32 %v128, 7
    %v130 = vsub.s32 %v127, %v129
    %v131 = vrot.slane %v123, %v130
    %v133 = vunpack.c.l.s4 1983009808
    %v134 = vunpack.c.0.s8 %v133
    %v135 = vlaneseq
    %v136 = vshrl.u32 %v135, 7
    %v137 = vsub.s32 %v134, %v136
    %v138 = vrot.slane %v124, %v137
    %v139 = vcombine.low %v131, %v138
    %v140 = vcombine.low %v108, %v112
    %v141 = vcombine.low %v116, %v120
    %v143 = vunpack.c.l.s4 1983009808
    %v144 = vunpack.c.0.s8 %v143
    %v145 = vlaneseq
    %v146 = vshrl.u32 %v145, 7
    %v147 = vsub.s32 %v144, %v146
    %v148 = vrot.slane %v140, %v147
    %v150 = vunpack.c.l.s4 1983009808
    %v151 = vunpack.c.0.s8 %v150
    %v152 = vlaneseq
    %v153 = vshrl.u32 %v152, 7
    %v154 = vsub.s32 %v151, %v153
    %v155 = vrot.slane %v141, %v154
    %v156 = vcombine.low %v148, %v155
    %v159 = vadd.f32 %v121, %v139
    %v160 = vadd.f32 %v122, %v156
    %vm161 = vcmask 261120
    %162 = vst.msk [vmem:[#allocation7] sm:$0xff] %vm161, %v159
    %163 = vst.msk [vmem:[#allocation7 + $0x8] sm:$0xff] %vm161, %v160
    // Predicated region
    $region18: #{tpu_custom_call.1} parent=1 // pred_check
      _
    $region19: #{tpu_custom_call.1} parent=1 // pred_check_branch
      %165 = sbr.rel (0) target = $region21
    $region20: #{tpu_custom_call.1} parent=1 // pred_region
      %s167 = ssub.s32 256, 256
      %168 = vsyncadd [#allocation4], %s167
      %s169 = sshll.u32 [#allocation7], 4
      %s170 = int_to_ptr.vmem [resolvable:$true] %s169
      %175 = dma.vmem_to_hbm [thread:$0]  %s170, 256, %s2, [#allocation4], 128, 128, 8
    $region21: #{tpu_custom_call.1} parent=1 // pred_fallthru
      _
    // Predicated region
    $region22: #{tpu_custom_call.1} parent=1 // pred_check
      _
    $region23: #{tpu_custom_call.1} parent=1 // pred_check_branch
      %177 = sbr.rel (0) target = $region25
    $region24: #{tpu_custom_call.1} parent=1 // pred_region
      %178 = dma.done [#allocation4], 256
    $region25: #{tpu_custom_call.1} parent=1 // pred_fallthru
      _
    %179 = vsyncpa [#allocation3], 1
    %180 = vsyncpa [#allocation6], 1
    %181 = vsyncpa [#allocation4], 1

</llo_original>
